<compile_context>
chip_gen: v7x
topology: tpu7x:2x2x1
jax: 0.10.0
libtpu: 0.0.40
codegen_flags: <defaults>
</compile_context>

<pallas_src>
import functools

import jax
import jax.numpy as jnp
import numpy as np
from jax import lax
from jax.experimental import pallas as pl
from jax.experimental.pallas import tpu as pltpu


def _round_up(x, m):
    return ((x + m - 1) // m) * m


def _auto_block_b(B):
    """Generation-aware batch tile: 1 grid step on v5e/v6e, >=2 blocks on v7x."""
    b128 = _round_up(B, 128)
    kind = ""
    try:
        kind = jax.devices()[0].device_kind.lower()
    except Exception:
        pass
    two_tensorcores = ("v7" in kind) or ("7x" in kind)
    cap = 2048  # (2048,16) f32 input tiles double-buffered ~= 4 MiB << VMEM limits
    if two_tensorcores and b128 >= 256:
        bb = _round_up((b128 + 1) // 2, 128)   # >=2 blocks so both TCs get work
    else:
        bb = b128                              # single step on 1-TC chips
    return max(128, min(bb, cap))


def _qfunc_kernel(s_ref, a_ref, w1s_ref, w1a_ref, w2_ref, w3_ref, bias_ref, o_ref):
    """One batch tile of the SAC Q-function MLP, batch-on-lanes layout.

    s_ref:   (bb, obs_dim)        a_ref:   (bb, act_dim)      [f32 or bf16]
    w1s_ref: (H1, obs_dim)        w1a_ref: (H1, act_dim)      [f32 or bf16]
    w2_ref:  (H2, H1)             w3_ref:  (1, H2)            [f32 or bf16]
    bias_ref:(Hmax, 3) f32 columns: [:H1,0]=b1, [:H2,1]=b2, [0,2]=b3
    o_ref:   (1, bb) f32  -- batch on the lane axis => lane-dense stores
    """
    f32 = jnp.float32
    H1 = w1s_ref.shape[0]
    H2 = w2_ref.shape[0]
    contract_feature = (((1,), (1,)), ((), ()))   # A . B^T (contract feature dims)

    # Layer 1 (concat fused via split W1): h1t = relu(W1s.s^T + W1a.a^T + b1)
    h1t = lax.dot_general(w1s_ref[...], s_ref[...], contract_feature,
                          preferred_element_type=f32)
    h1t = h1t + lax.dot_general(w1a_ref[...], a_ref[...], contract_feature,
                                preferred_element_type=f32)
    h1t = jnp.maximum(h1t + bias_ref[0:H1, 0:1], 0.0)          # (H1, bb) f32

    # Layer 2: h2t = relu(W2 . h1t + b2). Feed the MXU the weight's native dtype
    # (bf16 path casts the f32 accumulator down; f32 path stays f32).
    w2 = w2_ref[...]
    rhs2 = h1t if w2.dtype == f32 else h1t.astype(w2.dtype)
    h2t = jnp.dot(w2, rhs2, preferred_element_type=f32)
    h2t = jnp.maximum(h2t + bias_ref[0:H2, 1:2], 0.0)          # (H2, bb) f32

    # Layer 3 (Identity head), lane-dense: q^T = w3 . h2t + b3  -> (1, bb)
    w3 = w3_ref[...]
    rhs3 = h2t if w3.dtype == f32 else h2t.astype(w3.dtype)
    q = jnp.dot(w3, rhs3, preferred_element_type=f32) + bias_ref[0:1, 2:3]
    o_ref[...] = q.astype(o_ref.dtype)


@functools.partial(jax.jit, static_argnames=("block_b",))
def mlp_q_forward(s, a, w1, b1, w2, b2, w3, b3, *, block_b=None):
    """Pallas implementation of MLPQFunction.forward(s, a) -> (B,).

    Weights are torch-native layout: w_i is (fan_out, fan_in), b_i is (fan_out,).
    s/a and weights may be float32 or bfloat16 (bf16 halves HBM traffic and uses
    the MXU's native single-pass mode); accumulation, bias-add and ReLU are f32.

    block_b: batch rows per grid step (multiple of 128). Default None = auto:
    one grid step on v5e/v6e (1 TensorCore), >=2 "parallel" blocks on v7x (2 TCs).
    """
    B, obs_dim = s.shape
    act_dim = a.shape[-1]
    H1, d_in = w1.shape
    H2 = w2.shape[0]
    assert d_in == obs_dim + act_dim
    Hmax = max(H1, H2)

    # Torch-native (fan_out, fan_in) weights are already the layout the
    # transposed (batch-on-lanes) kernel wants -- slicing only, no transposes.
    w1s = w1[:, :obs_dim]                 # (H1, obs_dim)
    w1a = w1[:, obs_dim:]                 # (H1, act_dim)
    w3r = w3.reshape(1, H2)               # (1, H2)

    # Pack b1 / b2 / b3 into ONE tiny f32 stream, as column vectors so they
    # broadcast over the lane (batch) axis without any in-kernel transpose.
    bias_pack = jnp.zeros((Hmax, 3), jnp.float32)
    bias_pack = bias_pack.at[:H1, 0].set(b1.astype(jnp.float32))
    bias_pack = bias_pack.at[:H2, 1].set(b2.astype(jnp.float32))
    bias_pack = bias_pack.at[0, 2].set(b3.reshape(()).astype(jnp.float32))

    # Batch tile: multiple of 128 so the (1, bb) output block is lane-dense.
    b128 = _round_up(B, 128)
    if block_b is None:
        bb = _auto_block_b(B)
    else:
        bb = min(_round_up(max(1, block_b), 128), b128)
    Bp = _round_up(B, bb)
    if Bp != B:
        # Ragged-batch fallback only; tile-aligned batches never touch this.
        s = jnp.pad(s, ((0, Bp - B), (0, 0)))
        a = jnp.pad(a, ((0, Bp - B), (0, 0)))

    grid = (Bp // bb,)

    out = pl.pallas_call(
        _qfunc_kernel,
        out_shape=jax.ShapeDtypeStruct((1, Bp), jnp.float32),
        grid_spec=pltpu.PrefetchScalarGridSpec(
            num_scalar_prefetch=0,
            grid=grid,
            in_specs=[
                pl.BlockSpec((bb, obs_dim), lambda i: (i, 0)),    # s tile
                pl.BlockSpec((bb, act_dim), lambda i: (i, 0)),    # a tile
                pl.BlockSpec((H1, obs_dim), lambda i: (0, 0)),    # W1_s (resident)
                pl.BlockSpec((H1, act_dim), lambda i: (0, 0)),    # W1_a (resident)
                pl.BlockSpec((H2, H1), lambda i: (0, 0)),         # W2   (resident)
                pl.BlockSpec((1, H2), lambda i: (0, 0)),          # w3   (resident)
                pl.BlockSpec((Hmax, 3), lambda i: (0, 0)),        # packed biases
            ],
            out_specs=pl.BlockSpec((1, bb), lambda i: (0, i)),    # lane-dense q^T
        ),
        compiler_params=pltpu.CompilerParams(
            dimension_semantics=("parallel",),
        ),
    )(s, a, w1s, w1a, w2, w3r, bias_pack)

    # glue: torch.squeeze(q, -1) (+ drop ragged padding, if any)
    return out[0, :B]


def _init_linear(key, fan_in, fan_out):
    """torch.nn.Linear-style init & layout: W is (fan_out, fan_in), b is (fan_out,)."""
    kw, kb = jax.random.split(key)
    bound = 1.0 / np.sqrt(fan_in)
    w = jax.random.uniform(kw, (fan_out, fan_in), jnp.float32, -bound, bound)
    b = jax.random.uniform(kb, (fan_out,), jnp.float32, -bound, bound)
    return w, b


def _reference(s, a, w1, b1, w2, b2, w3, b3):
    hp = lax.Precision.HIGHEST
    f32 = jnp.float32
    x = jnp.concatenate([s.astype(f32), a.astype(f32)], axis=-1)
    h1 = jnp.maximum(jnp.dot(x, w1.T.astype(f32), precision=hp) + b1, 0.0)
    h2 = jnp.maximum(jnp.dot(h1, w2.T.astype(f32), precision=hp) + b2, 0.0)
    q = jnp.dot(h2, w3.T.astype(f32), precision=hp) + b3
    return jnp.squeeze(q, -1)


if __name__ == "__main__":
    # Shapes consistent with MLPQFunction(obs_dim, act_dim, hidden_sizes, ReLU).
    obs_dim, act_dim = 12, 4
    hidden_sizes = (32, 32)
    batch = 512

    key = jax.random.PRNGKey(0)
    ks, ka, k1, k2, k3 = jax.random.split(key, 5)

    s = jax.random.normal(ks, (batch, obs_dim), jnp.float32)
    a = jax.random.normal(ka, (batch, act_dim), jnp.float32)

    d_in = obs_dim + act_dim
    w1, b1 = _init_linear(k1, d_in, hidden_sizes[0])
    w2, b2 = _init_linear(k2, hidden_sizes[0], hidden_sizes[1])
    w3, b3 = _init_linear(k3, hidden_sizes[1], 1)

    q_ref = _reference(s, a, w1, b1, w2, b2, w3, b3)

    # 1) f32, auto block (single grid step on v5e/v6e; 2 "parallel" steps on v7x).
    q = jax.block_until_ready(mlp_q_forward(s, a, w1, b1, w2, b2, w3, b3))
    assert q.shape == (batch,), q.shape
    np.testing.assert_allclose(np.asarray(q), np.asarray(q_ref), rtol=2e-4, atol=2e-4)

    # 2) Explicit multi-block grid (4 x 128-row tiles) -- exercises the pipelined
    #    "parallel" batch axis on every generation.
    q4 = jax.block_until_ready(
        mlp_q_forward(s, a, w1, b1, w2, b2, w3, b3, block_b=128))
    np.testing.assert_allclose(np.asarray(q4), np.asarray(q_ref), rtol=2e-4, atol=2e-4)

    # 3) Ragged small batch (B=8 -> pads to one 128-row tile, padding sliced off).
    q_small = jax.block_until_ready(
        mlp_q_forward(s[:8], a[:8], w1, b1, w2, b2, w3, b3))
    assert q_small.shape == (8,), q_small.shape
    np.testing.assert_allclose(np.asarray(q_small), np.asarray(q_ref[:8]),
                               rtol=2e-4, atol=2e-4)

    # 4) bf16 activations/weights: native bf16 MXU operands, f32 accumulation.
    bf16 = jnp.bfloat16
    q_bf = jax.block_until_ready(
        mlp_q_forward(s.astype(bf16), a.astype(bf16),
                      w1.astype(bf16), b1, w2.astype(bf16), b2,
                      w3.astype(bf16), b3))
    q_ref_bf = _reference(s.astype(bf16), a.astype(bf16),
                          w1.astype(bf16).astype(jnp.float32), b1,
                          w2.astype(bf16).astype(jnp.float32), b2,
                          w3.astype(bf16).astype(jnp.float32), b3)
    np.testing.assert_allclose(np.asarray(q_bf), np.asarray(q_ref_bf),
                               rtol=2e-2, atol=2e-2)

    print("KERNEL_OK")
</pallas_src>

<mosaic_0001>
module attributes {stable_mosaic.version = 11 : i64} {
  func.func @_qfunc_kernel(%arg0: i32, %arg1: memref<512x12xf32, #tpu.memory_space<vmem>>, %arg2: memref<512x4xf32, #tpu.memory_space<vmem>>, %arg3: memref<32x12xf32, #tpu.memory_space<vmem>>, %arg4: memref<32x4xf32, #tpu.memory_space<vmem>>, %arg5: memref<32x32xf32, #tpu.memory_space<vmem>>, %arg6: memref<1x32xf32, #tpu.memory_space<vmem>>, %arg7: memref<32x3xf32, #tpu.memory_space<vmem>>, %arg8: memref<1x512xf32, #tpu.memory_space<vmem>>) attributes {dimension_semantics = [#tpu.dimension_semantics<parallel>], iteration_bounds = array<i64: 1>, scalar_prefetch = 0 : i64, scratch_operands = 0 : i64, tpu.core_type = #tpu.core_type<tc>, window_params = [{transform_indices = @transform_0, window_bounds = array<i64: 512, 12>}, {transform_indices = @transform_1, window_bounds = array<i64: 512, 4>}, {pipeline_mode = #tpu.pipeline_mode<synchronous>, transform_indices = @transform_2, window_bounds = array<i64: 32, 12>}, {pipeline_mode = #tpu.pipeline_mode<synchronous>, transform_indices = @transform_3, window_bounds = array<i64: 32, 4>}, {pipeline_mode = #tpu.pipeline_mode<synchronous>, transform_indices = @transform_4, window_bounds = array<i64: 32, 32>}, {pipeline_mode = #tpu.pipeline_mode<synchronous>, transform_indices = @transform_5, window_bounds = array<i64: 1, 32>}, {pipeline_mode = #tpu.pipeline_mode<synchronous>, transform_indices = @transform_6, window_bounds = array<i64: 32, 3>}, {transform_indices = @transform_7, window_bounds = array<i64: 1, 512>}]} {
    %c0 = arith.constant 0 : index
    %c0_0 = arith.constant 0 : index
    %0 = vector.load %arg3[%c0, %c0_0] : memref<32x12xf32, #tpu.memory_space<vmem>>, vector<32x12xf32>
    %c0_1 = arith.constant 0 : index
    %c0_2 = arith.constant 0 : index
    %1 = vector.load %arg1[%c0_1, %c0_2] : memref<512x12xf32, #tpu.memory_space<vmem>>, vector<512x12xf32>
    %cst = arith.constant dense<0.000000e+00> : vector<32x512xf32>
    %2 = tpu.matmul %0, %1, %cst {dimension_numbers = #tpu.dot_dimension_numbers<[1], [1], [0], [0], [0, 0, 1, 0], [], []>} : vector<32x12xf32>, vector<512x12xf32>, vector<32x512xf32> -> vector<32x512xf32>
    %c0_3 = arith.constant 0 : index
    %c0_4 = arith.constant 0 : index
    %3 = vector.load %arg4[%c0_3, %c0_4] : memref<32x4xf32, #tpu.memory_space<vmem>>, vector<32x4xf32>
    %c0_5 = arith.constant 0 : index
    %c0_6 = arith.constant 0 : index
    %4 = vector.load %arg2[%c0_5, %c0_6] : memref<512x4xf32, #tpu.memory_space<vmem>>, vector<512x4xf32>
    %cst_7 = arith.constant dense<0.000000e+00> : vector<32x512xf32>
    %5 = tpu.matmul %3, %4, %cst_7 {dimension_numbers = #tpu.dot_dimension_numbers<[1], [1], [0], [0], [0, 0, 1, 0], [], []>} : vector<32x4xf32>, vector<512x4xf32>, vector<32x512xf32> -> vector<32x512xf32>
    %6 = arith.addf %2, %5 : vector<32x512xf32>
    %c0_8 = arith.constant 0 : index
    %c0_9 = arith.constant 0 : index
    %7 = vector.load %arg7[%c0_8, %c0_9] : memref<32x3xf32, #tpu.memory_space<vmem>>, vector<32x1xf32>
    %8 = vector.broadcast %7 : vector<32x1xf32> to vector<32x512xf32>
    %9 = arith.addf %6, %8 : vector<32x512xf32>
    %cst_10 = arith.constant 0.000000e+00 : f32
    %10 = vector.broadcast %cst_10 : f32 to vector<32x512xf32>
    %11 = arith.maximumf %9, %10 : vector<32x512xf32>
    %c0_11 = arith.constant 0 : index
    %c0_12 = arith.constant 0 : index
    %12 = vector.load %arg5[%c0_11, %c0_12] : memref<32x32xf32, #tpu.memory_space<vmem>>, vector<32x32xf32>
    %cst_13 = arith.constant dense<0.000000e+00> : vector<32x512xf32>
    %13 = tpu.matmul %12, %11, %cst_13 {dimension_numbers = #tpu.dot_dimension_numbers<[1], [0], [0], [1], [0, 0, 1, 1], [], []>} : vector<32x32xf32>, vector<32x512xf32>, vector<32x512xf32> -> vector<32x512xf32>
    %c0_14 = arith.constant 0 : index
    %c1 = arith.constant 1 : index
    %14 = vector.load %arg7[%c0_14, %c1] : memref<32x3xf32, #tpu.memory_space<vmem>>, vector<32x1xf32>
    %15 = vector.broadcast %14 : vector<32x1xf32> to vector<32x512xf32>
    %16 = arith.addf %13, %15 : vector<32x512xf32>
    %cst_15 = arith.constant 0.000000e+00 : f32
    %17 = vector.broadcast %cst_15 : f32 to vector<32x512xf32>
    %18 = arith.maximumf %16, %17 : vector<32x512xf32>
    %c0_16 = arith.constant 0 : index
    %c0_17 = arith.constant 0 : index
    %19 = vector.load %arg6[%c0_16, %c0_17] : memref<1x32xf32, #tpu.memory_space<vmem>>, vector<1x32xf32>
    %cst_18 = arith.constant dense<0.000000e+00> : vector<1x512xf32>
    %20 = tpu.matmul %19, %18, %cst_18 {dimension_numbers = #tpu.dot_dimension_numbers<[1], [0], [0], [1], [0, 0, 1, 1], [], []>} : vector<1x32xf32>, vector<32x512xf32>, vector<1x512xf32> -> vector<1x512xf32>
    %c0_19 = arith.constant 0 : index
    %c2 = arith.constant 2 : index
    %21 = vector.load %arg7[%c0_19, %c2] : memref<32x3xf32, #tpu.memory_space<vmem>>, vector<1x1xf32>
    %22 = vector.broadcast %21 : vector<1x1xf32> to vector<1x512xf32>
    %23 = arith.addf %20, %22 : vector<1x512xf32>
    %c0_20 = arith.constant 0 : index
    %c0_21 = arith.constant 0 : index
    %24 = vector.load %arg8[%c0_20, %c0_21] : memref<1x512xf32, #tpu.memory_space<vmem>>, vector<1x512xf32>
    tpu.vector_store %arg8[%c0_20, %c0_21], %23 {strides = array<i32>} : memref<1x512xf32, #tpu.memory_space<vmem>>, vector<1x512xf32>,
    return
  }
  func.func @transform_0(%arg0: i32) -> (i32, i32) {
    %c0_i32 = arith.constant 0 : i32
    %c0_i32_0 = arith.constant 0 : i32
    return %arg0, %c0_i32 : i32, i32
  }
  func.func @transform_1(%arg0: i32) -> (i32, i32) {
    %c0_i32 = arith.constant 0 : i32
    %c0_i32_0 = arith.constant 0 : i32
    return %arg0, %c0_i32 : i32, i32
  }
  func.func @transform_2(%arg0: i32) -> (i32, i32) {
    %c0_i32 = arith.constant 0 : i32
    %c0_i32_0 = arith.constant 0 : i32
    %c0_i32_1 = arith.constant 0 : i32
    return %c0_i32, %c0_i32_0 : i32, i32
  }
  func.func @transform_3(%arg0: i32) -> (i32, i32) {
    %c0_i32 = arith.constant 0 : i32
    %c0_i32_0 = arith.constant 0 : i32
    %c0_i32_1 = arith.constant 0 : i32
    return %c0_i32, %c0_i32_0 : i32, i32
  }
  func.func @transform_4(%arg0: i32) -> (i32, i32) {
    %c0_i32 = arith.constant 0 : i32
    %c0_i32_0 = arith.constant 0 : i32
    %c0_i32_1 = arith.constant 0 : i32
    return %c0_i32, %c0_i32_0 : i32, i32
  }
  func.func @transform_5(%arg0: i32) -> (i32, i32) {
    %c0_i32 = arith.constant 0 : i32
    %c0_i32_0 = arith.constant 0 : i32
    %c0_i32_1 = arith.constant 0 : i32
    return %c0_i32, %c0_i32_0 : i32, i32
  }
  func.func @transform_6(%arg0: i32) -> (i32, i32) {
    %c0_i32 = arith.constant 0 : i32
    %c0_i32_0 = arith.constant 0 : i32
    %c0_i32_1 = arith.constant 0 : i32
    return %c0_i32, %c0_i32_0 : i32, i32
  }
  func.func @transform_7(%arg0: i32) -> (i32, i32) {
    %c0_i32 = arith.constant 0 : i32
    %c0_i32_0 = arith.constant 0 : i32
    return %c0_i32, %arg0 : i32, i32
  }
}

</mosaic_0001>

<llo_original>
// kernel: mlp_q_forward.1
$region0: #{mlp_q_forward.1}
  #allocation0 [shape = 'u32[]', space=smem, size = 0x4, offset = 0x4, fixed_abs, tag = 'smem constant byte address 0x4 - core index']
  #allocation1 [shape = 'u32[144,128]{1,0:T(1,128)}', space=vmem, size = 0x12000, scoped, tag = 'internal scratch']
  %s0 = inlined_call_operand.vmem [shape: f32[512,12], index: 0, kind: input, shape index: {}]
  %s1 = inlined_call_operand.vmem [shape: f32[512,4], index: 1, kind: input, shape index: {}]
  %s2 = inlined_call_operand.vmem [shape: f32[32,12], index: 2, kind: input, shape index: {}]
  %s3 = inlined_call_operand.vmem [shape: f32[32,4], index: 3, kind: input, shape index: {}]
  %s4 = inlined_call_operand.vmem [shape: f32[32,32], index: 4, kind: input, shape index: {}]
  %s5 = inlined_call_operand.vmem [shape: f32[1,32], index: 5, kind: input, shape index: {}]
  %s6 = inlined_call_operand.vmem [shape: f32[32,3], index: 6, kind: input, shape index: {}]
  %s7 = inlined_call_operand.hbm [shape: f32[1,512], index: 7, kind: output, shape index: {}]
  %s8 = sld [smem:[#allocation0]]
  $region38: #{mlp_q_forward.1} parent=0
    _
  %s10 = ssub.s32 1, %s8
  %s11 = scalar_select 0, %s10, %s8
  $region1: #{mlp_q_forward.1} parent=0
    #allocation2 [shape = 'u8[2048]{0}', space=vmem, size = 0x800, scoped, tag = 'output window, operand 0, single buffered']
    #allocation3 [shape = 's32[1]{0}', space=sflag, size = 0x4, scoped, tag = 'scoped memory for mlp_q_forward.1']
    %12 = vsyncpa [#allocation3], 0
    // Predicated region
    $region2: #{mlp_q_forward.1} parent=1 // pred_check
      _
    $region3: #{mlp_q_forward.1} parent=1 // pred_check_branch
      %14 = sbr.rel (0) target = $region5
    $region4: #{mlp_q_forward.1} parent=1 // pred_region
      _
    $region5: #{mlp_q_forward.1} parent=1 // pred_fallthru
      _
    // Predicated region
    $region6: #{mlp_q_forward.1} parent=1 // pred_check
      _
    $region7: #{mlp_q_forward.1} parent=1 // pred_check_branch
      %16 = sbr.rel (0) target = $region9
    $region8: #{mlp_q_forward.1} parent=1 // pred_region
      _
    $region9: #{mlp_q_forward.1} parent=1 // pred_fallthru
      _
    // Predicated region
    $region10: #{mlp_q_forward.1} parent=1 // pred_check
      _
    $region11: #{mlp_q_forward.1} parent=1 // pred_check_branch
      %18 = sbr.rel (0) target = $region13
    $region12: #{mlp_q_forward.1} parent=1 // pred_region
      _
    $region13: #{mlp_q_forward.1} parent=1 // pred_fallthru
      _
    // Predicated region
    $region14: #{mlp_q_forward.1} parent=1 // pred_check
      _
    $region15: #{mlp_q_forward.1} parent=1 // pred_check_branch
      %20 = sbr.rel (0) target = $region17
    $region16: #{mlp_q_forward.1} parent=1 // pred_region
      _
    $region17: #{mlp_q_forward.1} parent=1 // pred_fallthru
      _
    // Predicated region
    $region18: #{mlp_q_forward.1} parent=1 // pred_check
      _
    $region19: #{mlp_q_forward.1} parent=1 // pred_check_branch
      %22 = sbr.rel (0) target = $region21
    $region20: #{mlp_q_forward.1} parent=1 // pred_region
      _
    $region21: #{mlp_q_forward.1} parent=1 // pred_fallthru
      _
    // Predicated region
    $region22: #{mlp_q_forward.1} parent=1 // pred_check
      _
    $region23: #{mlp_q_forward.1} parent=1 // pred_check_branch
      %24 = sbr.rel (0) target = $region25
    $region24: #{mlp_q_forward.1} parent=1 // pred_region
      _
    $region25: #{mlp_q_forward.1} parent=1 // pred_fallthru
      _
    // Predicated region
    $region26: #{mlp_q_forward.1} parent=1 // pred_check
      _
    $region27: #{mlp_q_forward.1} parent=1 // pred_check_branch
      %26 = sbr.rel (0) target = $region29
    $region28: #{mlp_q_forward.1} parent=1 // pred_region
      _
    $region29: #{mlp_q_forward.1} parent=1 // pred_fallthru
      _
    %v27 = vld [vmem:[%s2] sm:$0xff]
    %v28 = vld [vmem:[%s2 + $0x8] sm:$0xff]
    %v29 = vld [vmem:[%s2 + $0x10] sm:$0xff]
    %v30 = vld [vmem:[%s2 + $0x18] sm:$0xff]
    %v31 = vld [vmem:[%s0] sm:$0xff]
    %v32 = vld [vmem:[%s0 + $0x8] sm:$0xff]
    %v33 = vld [vmem:[%s0 + $0x10] sm:$0xff]
    %v34 = vld [vmem:[%s0 + $0x18] sm:$0xff]
    %v35 = vld [vmem:[%s0 + $0x20] sm:$0xff]
    %v36 = vld [vmem:[%s0 + $0x28] sm:$0xff]
    %v37 = vld [vmem:[%s0 + $0x30] sm:$0xff]
    %v38 = vld [vmem:[%s0 + $0x38] sm:$0xff]
    %v39 = vld [vmem:[%s0 + $0x40] sm:$0xff]
    %v40 = vld [vmem:[%s0 + $0x48] sm:$0xff]
    %v41 = vld [vmem:[%s0 + $0x50] sm:$0xff]
    %v42 = vld [vmem:[%s0 + $0x58] sm:$0xff]
    %v43 = vld [vmem:[%s0 + $0x60] sm:$0xff]
    %v44 = vld [vmem:[%s0 + $0x68] sm:$0xff]
    %v45 = vld [vmem:[%s0 + $0x70] sm:$0xff]
    %v46 = vld [vmem:[%s0 + $0x78] sm:$0xff]
    %v47 = vld [vmem:[%s0 + $0x80] sm:$0xff]
    %v48 = vld [vmem:[%s0 + $0x88] sm:$0xff]
    %v49 = vld [vmem:[%s0 + $0x90] sm:$0xff]
    %v50 = vld [vmem:[%s0 + $0x98] sm:$0xff]
    %v51 = vld [vmem:[%s0 + $0xa0] sm:$0xff]
    %v52 = vld [vmem:[%s0 + $0xa8] sm:$0xff]
    %v53 = vld [vmem:[%s0 + $0xb0] sm:$0xff]
    %v54 = vld [vmem:[%s0 + $0xb8] sm:$0xff]
    %v55 = vld [vmem:[%s0 + $0xc0] sm:$0xff]
    %v56 = vld [vmem:[%s0 + $0xc8] sm:$0xff]
    %v57 = vld [vmem:[%s0 + $0xd0] sm:$0xff]
    %v58 = vld [vmem:[%s0 + $0xd8] sm:$0xff]
    %v59 = vld [vmem:[%s0 + $0xe0] sm:$0xff]
    %v60 = vld [vmem:[%s0 + $0xe8] sm:$0xff]
    %v61 = vld [vmem:[%s0 + $0xf0] sm:$0xff]
    %v62 = vld [vmem:[%s0 + $0xf8] sm:$0xff]
    %v63 = vld [vmem:[%s0 + $0x100] sm:$0xff]
    %v64 = vld [vmem:[%s0 + $0x108] sm:$0xff]
    %v65 = vld [vmem:[%s0 + $0x110] sm:$0xff]
    %v66 = vld [vmem:[%s0 + $0x118] sm:$0xff]
    %v67 = vld [vmem:[%s0 + $0x120] sm:$0xff]
    %v68 = vld [vmem:[%s0 + $0x128] sm:$0xff]
    %v69 = vld [vmem:[%s0 + $0x130] sm:$0xff]
    %v70 = vld [vmem:[%s0 + $0x138] sm:$0xff]
    %v71 = vld [vmem:[%s0 + $0x140] sm:$0xff]
    %v72 = vld [vmem:[%s0 + $0x148] sm:$0xff]
    %v73 = vld [vmem:[%s0 + $0x150] sm:$0xff]
    %v74 = vld [vmem:[%s0 + $0x158] sm:$0xff]
    %v75 = vld [vmem:[%s0 + $0x160] sm:$0xff]
    %v76 = vld [vmem:[%s0 + $0x168] sm:$0xff]
    %v77 = vld [vmem:[%s0 + $0x170] sm:$0xff]
    %v78 = vld [vmem:[%s0 + $0x178] sm:$0xff]
    %v79 = vld [vmem:[%s0 + $0x180] sm:$0xff]
    %v80 = vld [vmem:[%s0 + $0x188] sm:$0xff]
    %v81 = vld [vmem:[%s0 + $0x190] sm:$0xff]
    %v82 = vld [vmem:[%s0 + $0x198] sm:$0xff]
    %v83 = vld [vmem:[%s0 + $0x1a0] sm:$0xff]
    %v84 = vld [vmem:[%s0 + $0x1a8] sm:$0xff]
    %v85 = vld [vmem:[%s0 + $0x1b0] sm:$0xff]
    %v86 = vld [vmem:[%s0 + $0x1b8] sm:$0xff]
    %v87 = vld [vmem:[%s0 + $0x1c0] sm:$0xff]
    %v88 = vld [vmem:[%s0 + $0x1c8] sm:$0xff]
    %v89 = vld [vmem:[%s0 + $0x1d0] sm:$0xff]
    %v90 = vld [vmem:[%s0 + $0x1d8] sm:$0xff]
    %v91 = vld [vmem:[%s0 + $0x1e0] sm:$0xff]
    %v92 = vld [vmem:[%s0 + $0x1e8] sm:$0xff]
    %v93 = vld [vmem:[%s0 + $0x1f0] sm:$0xff]
    %v94 = vld [vmem:[%s0 + $0x1f8] sm:$0xff]
    %v95 = vld [vmem:[%s3] sm:$0xff]
    %v96 = vld [vmem:[%s3 + $0x8] sm:$0xff]
    %v97 = vld [vmem:[%s3 + $0x10] sm:$0xff]
    %v98 = vld [vmem:[%s3 + $0x18] sm:$0xff]
    %v99 = vld [vmem:[%s1] sm:$0xff]
    %v100 = vld [vmem:[%s1 + $0x8] sm:$0xff]
    %v101 = vld [vmem:[%s1 + $0x10] sm:$0xff]
    %v102 = vld [vmem:[%s1 + $0x18] sm:$0xff]
    %v103 = vld [vmem:[%s1 + $0x20] sm:$0xff]
    %v104 = vld [vmem:[%s1 + $0x28] sm:$0xff]
    %v105 = vld [vmem:[%s1 + $0x30] sm:$0xff]
    %v106 = vld [vmem:[%s1 + $0x38] sm:$0xff]
    %v107 = vld [vmem:[%s1 + $0x40] sm:$0xff]
    %v108 = vld [vmem:[%s1 + $0x48] sm:$0xff]
    %v109 = vld [vmem:[%s1 + $0x50] sm:$0xff]
    %v110 = vld [vmem:[%s1 + $0x58] sm:$0xff]
    %v111 = vld [vmem:[%s1 + $0x60] sm:$0xff]
    %v112 = vld [vmem:[%s1 + $0x68] sm:$0xff]
    %v113 = vld [vmem:[%s1 + $0x70] sm:$0xff]
    %v114 = vld [vmem:[%s1 + $0x78] sm:$0xff]
    %v115 = vld [vmem:[%s1 + $0x80] sm:$0xff]
    %v116 = vld [vmem:[%s1 + $0x88] sm:$0xff]
    %v117 = vld [vmem:[%s1 + $0x90] sm:$0xff]
    %v118 = vld [vmem:[%s1 + $0x98] sm:$0xff]
    %v119 = vld [vmem:[%s1 + $0xa0] sm:$0xff]
    %v120 = vld [vmem:[%s1 + $0xa8] sm:$0xff]
    %v121 = vld [vmem:[%s1 + $0xb0] sm:$0xff]
    %v122 = vld [vmem:[%s1 + $0xb8] sm:$0xff]
    %v123 = vld [vmem:[%s1 + $0xc0] sm:$0xff]
    %v124 = vld [vmem:[%s1 + $0xc8] sm:$0xff]
    %v125 = vld [vmem:[%s1 + $0xd0] sm:$0xff]
    %v126 = vld [vmem:[%s1 + $0xd8] sm:$0xff]
    %v127 = vld [vmem:[%s1 + $0xe0] sm:$0xff]
    %v128 = vld [vmem:[%s1 + $0xe8] sm:$0xff]
    %v129 = vld [vmem:[%s1 + $0xf0] sm:$0xff]
    %v130 = vld [vmem:[%s1 + $0xf8] sm:$0xff]
    %v131 = vld [vmem:[%s1 + $0x100] sm:$0xff]
    %v132 = vld [vmem:[%s1 + $0x108] sm:$0xff]
    %v133 = vld [vmem:[%s1 + $0x110] sm:$0xff]
    %v134 = vld [vmem:[%s1 + $0x118] sm:$0xff]
    %v135 = vld [vmem:[%s1 + $0x120] sm:$0xff]
    %v136 = vld [vmem:[%s1 + $0x128] sm:$0xff]
    %v137 = vld [vmem:[%s1 + $0x130] sm:$0xff]
    %v138 = vld [vmem:[%s1 + $0x138] sm:$0xff]
    %v139 = vld [vmem:[%s1 + $0x140] sm:$0xff]
    %v140 = vld [vmem:[%s1 + $0x148] sm:$0xff]
    %v141 = vld [vmem:[%s1 + $0x150] sm:$0xff]
    %v142 = vld [vmem:[%s1 + $0x158] sm:$0xff]
    %v143 = vld [vmem:[%s1 + $0x160] sm:$0xff]
    %v144 = vld [vmem:[%s1 + $0x168] sm:$0xff]
    %v145 = vld [vmem:[%s1 + $0x170] sm:$0xff]
    %v146 = vld [vmem:[%s1 + $0x178] sm:$0xff]
    %v147 = vld [vmem:[%s1 + $0x180] sm:$0xff]
    %v148 = vld [vmem:[%s1 + $0x188] sm:$0xff]
    %v149 = vld [vmem:[%s1 + $0x190] sm:$0xff]
    %v150 = vld [vmem:[%s1 + $0x198] sm:$0xff]
    %v151 = vld [vmem:[%s1 + $0x1a0] sm:$0xff]
    %v152 = vld [vmem:[%s1 + $0x1a8] sm:$0xff]
    %v153 = vld [vmem:[%s1 + $0x1b0] sm:$0xff]
    %v154 = vld [vmem:[%s1 + $0x1b8] sm:$0xff]
    %v155 = vld [vmem:[%s1 + $0x1c0] sm:$0xff]
    %v156 = vld [vmem:[%s1 + $0x1c8] sm:$0xff]
    %v157 = vld [vmem:[%s1 + $0x1d0] sm:$0xff]
    %v158 = vld [vmem:[%s1 + $0x1d8] sm:$0xff]
    %v159 = vld [vmem:[%s1 + $0x1e0] sm:$0xff]
    %v160 = vld [vmem:[%s1 + $0x1e8] sm:$0xff]
    %v161 = vld [vmem:[%s1 + $0x1f0] sm:$0xff]
    %v162 = vld [vmem:[%s1 + $0x1f8] sm:$0xff]
    %vm163 = vcmask 31744
    %v165 = vsel %vm163, %v95, 0
    %v168 = vsel %vm163, %v96, 0
    %v171 = vsel %vm163, %v97, 0
    %v174 = vsel %vm163, %v98, 0
    %v177 = vsel %vm163, %v99, 0
    %v180 = vsel %vm163, %v100, 0
    %v183 = vsel %vm163, %v101, 0
    %v186 = vsel %vm163, %v102, 0
    %v189 = vsel %vm163, %v103, 0
    %v192 = vsel %vm163, %v104, 0
    %v195 = vsel %vm163, %v105, 0
    %v198 = vsel %vm163, %v106, 0
    %v201 = vsel %vm163, %v107, 0
    %v204 = vsel %vm163, %v108, 0
    %v207 = vsel %vm163, %v109, 0
    %v210 = vsel %vm163, %v110, 0
    %v213 = vsel %vm163, %v111, 0
    %v216 = vsel %vm163, %v112, 0
    %v219 = vsel %vm163, %v113, 0
    %v222 = vsel %vm163, %v114, 0
    %v225 = vsel %vm163, %v115, 0
    %v228 = vsel %vm163, %v116, 0
    %v231 = vsel %vm163, %v117, 0
    %v234 = vsel %vm163, %v118, 0
    %v237 = vsel %vm163, %v119, 0
    %v240 = vsel %vm163, %v120, 0
    %v243 = vsel %vm163, %v121, 0
    %v246 = vsel %vm163, %v122, 0
    %v249 = vsel %vm163, %v123, 0
    %v252 = vsel %vm163, %v124, 0
    %v255 = vsel %vm163, %v125, 0
    %v258 = vsel %vm163, %v126, 0
    %v261 = vsel %vm163, %v127, 0
    %v264 = vsel %vm163, %v128, 0
    %v267 = vsel %vm163, %v129, 0
    %v270 = vsel %vm163, %v130, 0
    %v273 = vsel %vm163, %v131, 0
    %v276 = vsel %vm163, %v132, 0
    %v279 = vsel %vm163, %v133, 0
    %v282 = vsel %vm163, %v134, 0
    %v285 = vsel %vm163, %v135, 0
    %v288 = vsel %vm163, %v136, 0
    %v291 = vsel %vm163, %v137, 0
    %v294 = vsel %vm163, %v138, 0
    %v297 = vsel %vm163, %v139, 0
    %v300 = vsel %vm163, %v140, 0
    %v303 = vsel %vm163, %v141, 0
    %v306 = vsel %vm163, %v142, 0
    %v309 = vsel %vm163, %v143, 0
    %v312 = vsel %vm163, %v144, 0
    %v315 = vsel %vm163, %v145, 0
    %v318 = vsel %vm163, %v146, 0
    %v321 = vsel %vm163, %v147, 0
    %v324 = vsel %vm163, %v148, 0
    %v327 = vsel %vm163, %v149, 0
    %v330 = vsel %vm163, %v150, 0
    %v333 = vsel %vm163, %v151, 0
    %v336 = vsel %vm163, %v152, 0
    %v339 = vsel %vm163, %v153, 0
    %v342 = vsel %vm163, %v154, 0
    %v345 = vsel %vm163, %v155, 0
    %v348 = vsel %vm163, %v156, 0
    %v351 = vsel %vm163, %v157, 0
    %v354 = vsel %vm163, %v158, 0
    %v357 = vsel %vm163, %v159, 0
    %v360 = vsel %vm163, %v160, 0
    %v363 = vsel %vm163, %v161, 0
    %v366 = vsel %vm163, %v162, 0
    %368 = vmatprep.subr.mxu0 0.0
    %369 = vmatpush1.xpose.msra.mxu0 %v177
    %370 = vmatprep.subr.mxu0 0.0
    %371 = vmatpush1.xpose.msra.mxu0 %v180
    %372 = vmatprep.subr.mxu0 0.0
    %373 = vmatpush1.xpose.msra.mxu0 %v183
    %374 = vmatprep.subr.mxu0 0.0
    %375 = vmatpush1.xpose.msra.mxu0 %v186
    %376 = vmatprep.subr.mxu0 0.0
    %377 = vmatpush1.xpose.msra.mxu0 %v189
    %378 = vmatprep.subr.mxu0 0.0
    %379 = vmatpush1.xpose.msra.mxu0 %v192
    %380 = vmatprep.subr.mxu0 0.0
    %381 = vmatpush1.xpose.msra.mxu0 %v195
    %382 = vmatprep.subr.mxu0 0.0
    %383 = vmatpush1.xpose.msra.mxu0 %v198
    %384 = vmatprep.subr.mxu0 0.0
    %385 = vmatpush1.xpose.msra.mxu0 %v201
    %386 = vmatprep.subr.mxu0 0.0
    %387 = vmatpush1.xpose.msra.mxu0 %v204
    %388 = vmatprep.subr.mxu0 0.0
    %389 = vmatpush1.xpose.msra.mxu0 %v207
    %390 = vmatprep.subr.mxu0 0.0
    %391 = vmatpush1.xpose.msra.mxu0 %v210
    %392 = vmatprep.subr.mxu0 0.0
    %393 = vmatpush1.xpose.msra.mxu0 %v213
    %394 = vmatprep.subr.mxu0 0.0
    %395 = vmatpush1.xpose.msra.mxu0 %v216
    %396 = vmatprep.subr.mxu0 0.0
    %397 = vmatpush1.xpose.msra.mxu0 %v219
    %398 = vmatprep.subr.mxu0 0.0
    %399 = vmatpush1.xpose.msra.mxu0 %v222
    %400 = vmatprep.subr.mxu0 0.0
    %401 = vmatpush1.xpose.msra.mxu0 %v225
    %402 = vmatprep.subr.mxu0 0.0
    %403 = vmatpush1.xpose.msra.mxu0 %v228
    %404 = vmatprep.subr.mxu0 0.0
    %405 = vmatpush1.xpose.msra.mxu0 %v231
    %406 = vmatprep.subr.mxu0 0.0
    %407 = vmatpush1.xpose.msra.mxu0 %v234
    %408 = vmatprep.subr.mxu0 0.0
    %409 = vmatpush1.xpose.msra.mxu0 %v237
    %410 = vmatprep.subr.mxu0 0.0
    %411 = vmatpush1.xpose.msra.mxu0 %v240
    %412 = vmatprep.subr.mxu0 0.0
    %413 = vmatpush1.xpose.msra.mxu0 %v243
    %414 = vmatprep.subr.mxu0 0.0
    %415 = vmatpush1.xpose.msra.mxu0 %v246
    %416 = vmatprep.subr.mxu0 0.0
    %417 = vmatpush1.xpose.msra.mxu0 %v249
    %418 = vmatprep.subr.mxu0 0.0
    %419 = vmatpush1.xpose.msra.mxu0 %v252
    %420 = vmatprep.subr.mxu0 0.0
    %421 = vmatpush1.xpose.msra.mxu0 %v255
    %422 = vmatprep.subr.mxu0 0.0
    %423 = vmatpush1.xpose.msra.mxu0 %v258
    %424 = vmatprep.subr.mxu0 0.0
    %425 = vmatpush1.xpose.msra.mxu0 %v261
    %426 = vmatprep.subr.mxu0 0.0
    %427 = vmatpush1.xpose.msra.mxu0 %v264
    %428 = vmatprep.subr.mxu0 0.0
    %429 = vmatpush1.xpose.msra.mxu0 %v267
    %430 = vmatprep.subr.mxu0 0.0
    %431 = vmatpush1.xpose.msra.mxu0 %v270
    %432 = vmatprep.mubr.f32.mxu0 0.0
    %433 = vmatmul.mubr.f32.gmra.mrb[0].mxu0 %v165
    %v434 = vpop.f32.mrb[0].mxu0
    %v435 = vadd.f32 0.0, %v434
    %v436 = vpop.f32.mrb[0].mxu0
    %v437 = vadd.f32 0.0, %v436
    %438 = vmatprep.mubr.f32.mxu0 0.0
    %439 = vmatmul.mubr.f32.gmra.mrb[0].mxu0 %v168
    %v440 = vpop.f32.mrb[0].mxu0
    %v441 = vadd.f32 0.0, %v440
    %v442 = vpop.f32.mrb[0].mxu0
    %v443 = vadd.f32 0.0, %v442
    %444 = vmatprep.mubr.f32.mxu0 0.0
    %445 = vmatmul.mubr.f32.gmra.mrb[0].mxu0 %v171
    %v446 = vpop.f32.mrb[0].mxu0
    %v447 = vadd.f32 0.0, %v446
    %v448 = vpop.f32.mrb[0].mxu0
    %v449 = vadd.f32 0.0, %v448
    %450 = vmatprep.mubr.f32.mxu0 0.0
    %451 = vmatmul.mubr.f32.gmra.mrb[0].mxu0 %v174
    %v452 = vpop.f32.mrb[0].mxu0
    %v453 = vadd.f32 0.0, %v452
    %v454 = vpop.f32.mrb[0].mxu0
    %v455 = vadd.f32 0.0, %v454
    %456 = vdwg.mxu0
    %457 = vmatprep.subr.mxu0 0.0
    %458 = vmatpush1.xpose.msra.mxu0 %v273
    %459 = vmatprep.subr.mxu0 0.0
    %460 = vmatpush1.xpose.msra.mxu0 %v276
    %461 = vmatprep.subr.mxu0 0.0
    %462 = vmatpush1.xpose.msra.mxu0 %v279
    %463 = vmatprep.subr.mxu0 0.0
    %464 = vmatpush1.xpose.msra.mxu0 %v282
    %465 = vmatprep.subr.mxu0 0.0
    %466 = vmatpush1.xpose.msra.mxu0 %v285
    %467 = vmatprep.subr.mxu0 0.0
    %468 = vmatpush1.xpose.msra.mxu0 %v288
    %469 = vmatprep.subr.mxu0 0.0
    %470 = vmatpush1.xpose.msra.mxu0 %v291
    %471 = vmatprep.subr.mxu0 0.0
    %472 = vmatpush1.xpose.msra.mxu0 %v294
    %473 = vmatprep.subr.mxu0 0.0
    %474 = vmatpush1.xpose.msra.mxu0 %v297
    %475 = vmatprep.subr.mxu0 0.0
    %476 = vmatpush1.xpose.msra.mxu0 %v300
    %477 = vmatprep.subr.mxu0 0.0
    %478 = vmatpush1.xpose.msra.mxu0 %v303
    %479 = vmatprep.subr.mxu0 0.0
    %480 = vmatpush1.xpose.msra.mxu0 %v306
    %481 = vmatprep.subr.mxu0 0.0
    %482 = vmatpush1.xpose.msra.mxu0 %v309
    %483 = vmatprep.subr.mxu0 0.0
    %484 = vmatpush1.xpose.msra.mxu0 %v312
    %485 = vmatprep.subr.mxu0 0.0
    %486 = vmatpush1.xpose.msra.mxu0 %v315
    %487 = vmatprep.subr.mxu0 0.0
    %488 = vmatpush1.xpose.msra.mxu0 %v318
    %489 = vmatprep.subr.mxu0 0.0
    %490 = vmatpush1.xpose.msra.mxu0 %v321
    %491 = vmatprep.subr.mxu0 0.0
    %492 = vmatpush1.xpose.msra.mxu0 %v324
    %493 = vmatprep.subr.mxu0 0.0
    %494 = vmatpush1.xpose.msra.mxu0 %v327
    %495 = vmatprep.subr.mxu0 0.0
    %496 = vmatpush1.xpose.msra.mxu0 %v330
    %497 = vmatprep.subr.mxu0 0.0
    %498 = vmatpush1.xpose.msra.mxu0 %v333
    %499 = vmatprep.subr.mxu0 0.0
    %500 = vmatpush1.xpose.msra.mxu0 %v336
    %501 = vmatprep.subr.mxu0 0.0
    %502 = vmatpush1.xpose.msra.mxu0 %v339
    %503 = vmatprep.subr.mxu0 0.0
    %504 = vmatpush1.xpose.msra.mxu0 %v342
    %505 = vmatprep.subr.mxu0 0.0
    %506 = vmatpush1.xpose.msra.mxu0 %v345
    %507 = vmatprep.subr.mxu0 0.0
    %508 = vmatpush1.xpose.msra.mxu0 %v348
    %509 = vmatprep.subr.mxu0 0.0
    %510 = vmatpush1.xpose.msra.mxu0 %v351
    %511 = vmatprep.subr.mxu0 0.0
    %512 = vmatpush1.xpose.msra.mxu0 %v354
    %513 = vmatprep.subr.mxu0 0.0
    %514 = vmatpush1.xpose.msra.mxu0 %v357
    %515 = vmatprep.subr.mxu0 0.0
    %516 = vmatpush1.xpose.msra.mxu0 %v360
    %517 = vmatprep.subr.mxu0 0.0
    %518 = vmatpush1.xpose.msra.mxu0 %v363
    %519 = vmatprep.subr.mxu0 0.0
    %520 = vmatpush1.xpose.msra.mxu0 %v366
    %521 = vmatprep.mubr.f32.mxu0 0.0
    %522 = vmatmul.mubr.f32.gmra.mrb[0].mxu0 %v165
    %v523 = vpop.f32.mrb[0].mxu0
    %v524 = vadd.f32 0.0, %v523
    %v525 = vpop.f32.mrb[0].mxu0
    %v526 = vadd.f32 0.0, %v525
    %527 = vmatprep.mubr.f32.mxu0 0.0
    %528 = vmatmul.mubr.f32.gmra.mrb[0].mxu0 %v168
    %v529 = vpop.f32.mrb[0].mxu0
    %v530 = vadd.f32 0.0, %v529
    %v531 = vpop.f32.mrb[0].mxu0
    %v532 = vadd.f32 0.0, %v531
    %533 = vmatprep.mubr.f32.mxu0 0.0
    %534 = vmatmul.mubr.f32.gmra.mrb[0].mxu0 %v171
    %v535 = vpop.f32.mrb[0].mxu0
    %v536 = vadd.f32 0.0, %v535
    %v537 = vpop.f32.mrb[0].mxu0
    %v538 = vadd.f32 0.0, %v537
    %539 = vmatprep.mubr.f32.mxu0 0.0
    %540 = vmatmul.mubr.f32.gmra.mrb[0].mxu0 %v174
    %v541 = vpop.f32.mrb[0].mxu0
    %v542 = vadd.f32 0.0, %v541
    %v543 = vpop.f32.mrb[0].mxu0
    %v544 = vadd.f32 0.0, %v543
    %545 = vdwg.mxu0
    %vm546 = vcmask 97280
    %v548 = vsel %vm546, %v27, 0
    %v551 = vsel %vm546, %v28, 0
    %v554 = vsel %vm546, %v29, 0
    %v557 = vsel %vm546, %v30, 0
    %v560 = vsel %vm546, %v31, 0
    %v563 = vsel %vm546, %v32, 0
    %v566 = vsel %vm546, %v33, 0
    %v569 = vsel %vm546, %v34, 0
    %v572 = vsel %vm546, %v35, 0
    %v575 = vsel %vm546, %v36, 0
    %v578 = vsel %vm546, %v37, 0
    %v581 = vsel %vm546, %v38, 0
    %v584 = vsel %vm546, %v39, 0
    %v587 = vsel %vm546, %v40, 0
    %v590 = vsel %vm546, %v41, 0
    %v593 = vsel %vm546, %v42, 0
    %v596 = vsel %vm546, %v43, 0
    %v599 = vsel %vm546, %v44, 0
    %v602 = vsel %vm546, %v45, 0
    %v605 = vsel %vm546, %v46, 0
    %v608 = vsel %vm546, %v47, 0
    %v611 = vsel %vm546, %v48, 0
    %v614 = vsel %vm546, %v49, 0
    %v617 = vsel %vm546, %v50, 0
    %v620 = vsel %vm546, %v51, 0
    %v623 = vsel %vm546, %v52, 0
    %v626 = vsel %vm546, %v53, 0
    %v629 = vsel %vm546, %v54, 0
    %v632 = vsel %vm546, %v55, 0
    %v635 = vsel %vm546, %v56, 0
    %v638 = vsel %vm546, %v57, 0
    %v641 = vsel %vm546, %v58, 0
    %v644 = vsel %vm546, %v59, 0
    %v647 = vsel %vm546, %v60, 0
    %v650 = vsel %vm546, %v61, 0
    %v653 = vsel %vm546, %v62, 0
    %v656 = vsel %vm546, %v63, 0
    %v659 = vsel %vm546, %v64, 0
    %v662 = vsel %vm546, %v65, 0
    %v665 = vsel %vm546, %v66, 0
    %v668 = vsel %vm546, %v67, 0
    %v671 = vsel %vm546, %v68, 0
    %v674 = vsel %vm546, %v69, 0
    %v677 = vsel %vm546, %v70, 0
    %v680 = vsel %vm546, %v71, 0
    %v683 = vsel %vm546, %v72, 0
    %v686 = vsel %vm546, %v73, 0
    %v689 = vsel %vm546, %v74, 0
    %v692 = vsel %vm546, %v75, 0
    %v695 = vsel %vm546, %v76, 0
    %v698 = vsel %vm546, %v77, 0
    %v701 = vsel %vm546, %v78, 0
    %v704 = vsel %vm546, %v79, 0
    %v707 = vsel %vm546, %v80, 0
    %v710 = vsel %vm546, %v81, 0
    %v713 = vsel %vm546, %v82, 0
    %v716 = vsel %vm546, %v83, 0
    %v719 = vsel %vm546, %v84, 0
    %v722 = vsel %vm546, %v85, 0
    %v725 = vsel %vm546, %v86, 0
    %v728 = vsel %vm546, %v87, 0
    %v731 = vsel %vm546, %v88, 0
    %v734 = vsel %vm546, %v89, 0
    %v737 = vsel %vm546, %v90, 0
    %v740 = vsel %vm546, %v91, 0
    %v743 = vsel %vm546, %v92, 0
    %v746 = vsel %vm546, %v93, 0
    %v749 = vsel %vm546, %v94, 0
    %751 = vmatprep.subr.mxu0 0.0
    %752 = vmatpush1.xpose.msra.mxu0 %v560
    %753 = vmatprep.subr.mxu0 0.0
    %754 = vmatpush1.xpose.msra.mxu0 %v563
    %755 = vmatprep.subr.mxu0 0.0
    %756 = vmatpush1.xpose.msra.mxu0 %v566
    %757 = vmatprep.subr.mxu0 0.0
    %758 = vmatpush1.xpose.msra.mxu0 %v569
    %759 = vmatprep.subr.mxu0 0.0
    %760 = vmatpush1.xpose.msra.mxu0 %v572
    %761 = vmatprep.subr.mxu0 0.0
    %762 = vmatpush1.xpose.msra.mxu0 %v575
    %763 = vmatprep.subr.mxu0 0.0
    %764 = vmatpush1.xpose.msra.mxu0 %v578
    %765 = vmatprep.subr.mxu0 0.0
    %766 = vmatpush1.xpose.msra.mxu0 %v581
    %767 = vmatprep.subr.mxu0 0.0
    %768 = vmatpush1.xpose.msra.mxu0 %v584
    %769 = vmatprep.subr.mxu0 0.0
    %770 = vmatpush1.xpose.msra.mxu0 %v587
    %771 = vmatprep.subr.mxu0 0.0
    %772 = vmatpush1.xpose.msra.mxu0 %v590
    %773 = vmatprep.subr.mxu0 0.0
    %774 = vmatpush1.xpose.msra.mxu0 %v593
    %775 = vmatprep.subr.mxu0 0.0
    %776 = vmatpush1.xpose.msra.mxu0 %v596
    %777 = vmatprep.subr.mxu0 0.0
    %778 = vmatpush1.xpose.msra.mxu0 %v599
    %779 = vmatprep.subr.mxu0 0.0
    %780 = vmatpush1.xpose.msra.mxu0 %v602
    %781 = vmatprep.subr.mxu0 0.0
    %782 = vmatpush1.xpose.msra.mxu0 %v605
    %783 = vmatprep.subr.mxu0 0.0
    %784 = vmatpush1.xpose.msra.mxu0 %v608
    %785 = vmatprep.subr.mxu0 0.0
    %786 = vmatpush1.xpose.msra.mxu0 %v611
    %787 = vmatprep.subr.mxu0 0.0
    %788 = vmatpush1.xpose.msra.mxu0 %v614
    %789 = vmatprep.subr.mxu0 0.0
    %790 = vmatpush1.xpose.msra.mxu0 %v617
    %791 = vmatprep.subr.mxu0 0.0
    %792 = vmatpush1.xpose.msra.mxu0 %v620
    %793 = vmatprep.subr.mxu0 0.0
    %794 = vmatpush1.xpose.msra.mxu0 %v623
    %795 = vmatprep.subr.mxu0 0.0
    %796 = vmatpush1.xpose.msra.mxu0 %v626
    %797 = vmatprep.subr.mxu0 0.0
    %798 = vmatpush1.xpose.msra.mxu0 %v629
    %799 = vmatprep.subr.mxu0 0.0
    %800 = vmatpush1.xpose.msra.mxu0 %v632
    %801 = vmatprep.subr.mxu0 0.0
    %802 = vmatpush1.xpose.msra.mxu0 %v635
    %803 = vmatprep.subr.mxu0 0.0
    %804 = vmatpush1.xpose.msra.mxu0 %v638
    %805 = vmatprep.subr.mxu0 0.0
    %806 = vmatpush1.xpose.msra.mxu0 %v641
    %807 = vmatprep.subr.mxu0 0.0
    %808 = vmatpush1.xpose.msra.mxu0 %v644
    %809 = vmatprep.subr.mxu0 0.0
    %810 = vmatpush1.xpose.msra.mxu0 %v647
    %811 = vmatprep.subr.mxu0 0.0
    %812 = vmatpush1.xpose.msra.mxu0 %v650
    %813 = vmatprep.subr.mxu0 0.0
    %814 = vmatpush1.xpose.msra.mxu0 %v653
    %815 = vmatprep.mubr.f32.mxu0 0.0
    %816 = vmatmul.mubr.f32.gmra.mrb[0].mxu0 %v548
    %v817 = vpop.f32.mrb[0].mxu0
    %v818 = vadd.f32 %v435, %v817
    %v819 = vpop.f32.mrb[0].mxu0
    %v820 = vadd.f32 %v437, %v819
    %821 = vmatprep.mubr.f32.mxu0 0.0
    %822 = vmatmul.mubr.f32.gmra.mrb[0].mxu0 %v551
    %v823 = vpop.f32.mrb[0].mxu0
    %v824 = vadd.f32 %v441, %v823
    %v825 = vpop.f32.mrb[0].mxu0
    %v826 = vadd.f32 %v443, %v825
    %827 = vmatprep.mubr.f32.mxu0 0.0
    %828 = vmatmul.mubr.f32.gmra.mrb[0].mxu0 %v554
    %v829 = vpop.f32.mrb[0].mxu0
    %v830 = vadd.f32 %v447, %v829
    %v831 = vpop.f32.mrb[0].mxu0
    %v832 = vadd.f32 %v449, %v831
    %833 = vmatprep.mubr.f32.mxu0 0.0
    %834 = vmatmul.mubr.f32.gmra.mrb[0].mxu0 %v557
    %v835 = vpop.f32.mrb[0].mxu0
    %v836 = vadd.f32 %v453, %v835
    %v837 = vpop.f32.mrb[0].mxu0
    %v838 = vadd.f32 %v455, %v837
    %839 = vdwg.mxu0
    %840 = vmatprep.subr.mxu0 0.0
    %841 = vmatpush1.xpose.msra.mxu0 %v656
    %842 = vmatprep.subr.mxu0 0.0
    %843 = vmatpush1.xpose.msra.mxu0 %v659
    %844 = vmatprep.subr.mxu0 0.0
    %845 = vmatpush1.xpose.msra.mxu0 %v662
    %846 = vmatprep.subr.mxu0 0.0
    %847 = vmatpush1.xpose.msra.mxu0 %v665
    %848 = vmatprep.subr.mxu0 0.0
    %849 = vmatpush1.xpose.msra.mxu0 %v668
    %850 = vmatprep.subr.mxu0 0.0
    %851 = vmatpush1.xpose.msra.mxu0 %v671
    %852 = vmatprep.subr.mxu0 0.0
    %853 = vmatpush1.xpose.msra.mxu0 %v674
    %854 = vmatprep.subr.mxu0 0.0
    %855 = vmatpush1.xpose.msra.mxu0 %v677
    %856 = vmatprep.subr.mxu0 0.0
    %857 = vmatpush1.xpose.msra.mxu0 %v680
    %858 = vmatprep.subr.mxu0 0.0
    %859 = vmatpush1.xpose.msra.mxu0 %v683
    %860 = vmatprep.subr.mxu0 0.0
    %861 = vmatpush1.xpose.msra.mxu0 %v686
    %862 = vmatprep.subr.mxu0 0.0
    %863 = vmatpush1.xpose.msra.mxu0 %v689
    %864 = vmatprep.subr.mxu0 0.0
    %865 = vmatpush1.xpose.msra.mxu0 %v692
    %866 = vmatprep.subr.mxu0 0.0
    %867 = vmatpush1.xpose.msra.mxu0 %v695
    %868 = vmatprep.subr.mxu0 0.0
    %869 = vmatpush1.xpose.msra.mxu0 %v698
    %870 = vmatprep.subr.mxu0 0.0
    %871 = vmatpush1.xpose.msra.mxu0 %v701
    %872 = vmatprep.subr.mxu0 0.0
    %873 = vmatpush1.xpose.msra.mxu0 %v704
    %874 = vmatprep.subr.mxu0 0.0
    %875 = vmatpush1.xpose.msra.mxu0 %v707
    %876 = vmatprep.subr.mxu0 0.0
    %877 = vmatpush1.xpose.msra.mxu0 %v710
    %878 = vmatprep.subr.mxu0 0.0
    %879 = vmatpush1.xpose.msra.mxu0 %v713
    %880 = vmatprep.subr.mxu0 0.0
    %881 = vmatpush1.xpose.msra.mxu0 %v716
    %882 = vmatprep.subr.mxu0 0.0
    %883 = vmatpush1.xpose.msra.mxu0 %v719
    %884 = vmatprep.subr.mxu0 0.0
    %885 = vmatpush1.xpose.msra.mxu0 %v722
    %886 = vmatprep.subr.mxu0 0.0
    %887 = vmatpush1.xpose.msra.mxu0 %v725
    %888 = vmatprep.subr.mxu0 0.0
    %889 = vmatpush1.xpose.msra.mxu0 %v728
    %890 = vmatprep.subr.mxu0 0.0
    %891 = vmatpush1.xpose.msra.mxu0 %v731
    %892 = vmatprep.subr.mxu0 0.0
    %893 = vmatpush1.xpose.msra.mxu0 %v734
    %894 = vmatprep.subr.mxu0 0.0
    %895 = vmatpush1.xpose.msra.mxu0 %v737
    %896 = vmatprep.subr.mxu0 0.0
    %897 = vmatpush1.xpose.msra.mxu0 %v740
    %898 = vmatprep.subr.mxu0 0.0
    %899 = vmatpush1.xpose.msra.mxu0 %v743
    %900 = vmatprep.subr.mxu0 0.0
    %901 = vmatpush1.xpose.msra.mxu0 %v746
    %902 = vmatprep.subr.mxu0 0.0
    %903 = vmatpush1.xpose.msra.mxu0 %v749
    %904 = vmatprep.mubr.f32.mxu0 0.0
    %905 = vmatmul.mubr.f32.gmra.mrb[0].mxu0 %v548
    %v906 = vpop.f32.mrb[0].mxu0
    %v907 = vadd.f32 %v524, %v906
    %v908 = vpop.f32.mrb[0].mxu0
    %v909 = vadd.f32 %v526, %v908
    %910 = vmatprep.mubr.f32.mxu0 0.0
    %911 = vmatmul.mubr.f32.gmra.mrb[0].mxu0 %v551
    %v912 = vpop.f32.mrb[0].mxu0
    %v913 = vadd.f32 %v530, %v912
    %v914 = vpop.f32.mrb[0].mxu0
    %v915 = vadd.f32 %v532, %v914
    %916 = vmatprep.mubr.f32.mxu0 0.0
    %917 = vmatmul.mubr.f32.gmra.mrb[0].mxu0 %v554
    %v918 = vpop.f32.mrb[0].mxu0
    %v919 = vadd.f32 %v536, %v918
    %v920 = vpop.f32.mrb[0].mxu0
    %v921 = vadd.f32 %v538, %v920
    %922 = vmatprep.mubr.f32.mxu0 0.0
    %923 = vmatmul.mubr.f32.gmra.mrb[0].mxu0 %v557
    %v924 = vpop.f32.mrb[0].mxu0
    %v925 = vadd.f32 %v542, %v924
    %v926 = vpop.f32.mrb[0].mxu0
    %v927 = vadd.f32 %v544, %v926
    %928 = vdwg.mxu0
    %v929 = vld [vmem:[%s6] sm:$0xff]
    %v930 = vld [vmem:[%s6 + $0x8] sm:$0xff]
    %v931 = vld [vmem:[%s6 + $0x10] sm:$0xff]
    %v932 = vld [vmem:[%s6 + $0x18] sm:$0xff]
    %934 = vset.pattern.permute.xlu0 0
    %935 = vperm.xlu0 %934, %v929
    %v936 = vpop.permute.xlu0 %935
    %939 = vset.pattern.permute.xlu0 0
    %940 = vperm.xlu0 %939, %v930
    %v941 = vpop.permute.xlu0 %940
    %944 = vset.pattern.permute.xlu0 0
    %945 = vperm.xlu0 %944, %v931
    %v946 = vpop.permute.xlu0 %945
    %949 = vset.pattern.permute.xlu0 0
    %950 = vperm.xlu0 %949, %v932
    %v951 = vpop.permute.xlu0 %950
    %v953 = vadd.f32 %v818, %v936
    %v954 = vadd.f32 %v820, %v936
    %v955 = vadd.f32 %v907, %v936
    %v956 = vadd.f32 %v909, %v936
    %v957 = vadd.f32 %v824, %v941
    %v958 = vadd.f32 %v826, %v941
    %v959 = vadd.f32 %v913, %v941
    %v960 = vadd.f32 %v915, %v941
    %v961 = vadd.f32 %v830, %v946
    %v962 = vadd.f32 %v832, %v946
    %v963 = vadd.f32 %v919, %v946
    %v964 = vadd.f32 %v921, %v946
    %v965 = vadd.f32 %v836, %v951
    %v966 = vadd.f32 %v838, %v951
    %v967 = vadd.f32 %v925, %v951
    %v968 = vadd.f32 %v927, %v951
    %v969 = vmax.f32 %v953, 0.0
    %v970 = vmax.f32 %v954, 0.0
    %v971 = vmax.f32 %v955, 0.0
    %v972 = vmax.f32 %v956, 0.0
    %v973 = vmax.f32 %v957, 0.0
    %v974 = vmax.f32 %v958, 0.0
    %v975 = vmax.f32 %v959, 0.0
    %v976 = vmax.f32 %v960, 0.0
    %v977 = vmax.f32 %v961, 0.0
    %v978 = vmax.f32 %v962, 0.0
    %v979 = vmax.f32 %v963, 0.0
    %v980 = vmax.f32 %v964, 0.0
    %v981 = vmax.f32 %v965, 0.0
    %v982 = vmax.f32 %v966, 0.0
    %v983 = vmax.f32 %v967, 0.0
    %v984 = vmax.f32 %v968, 0.0
    %v985 = vld [vmem:[%s4] sm:$0xff]
    %v986 = vld [vmem:[%s4 + $0x8] sm:$0xff]
    %v987 = vld [vmem:[%s4 + $0x10] sm:$0xff]
    %v988 = vld [vmem:[%s4 + $0x18] sm:$0xff]
    %989 = vset.pattern.permute.xlu0 1
    %990 = vperm.xlu0 %989, %v929
    %v991 = vpop.permute.xlu0 %990
    %993 = vset.pattern.permute.xlu0 1
    %994 = vperm.xlu0 %993, %v930
    %v995 = vpop.permute.xlu0 %994
    %997 = vset.pattern.permute.xlu0 1
    %998 = vperm.xlu0 %997, %v931
    %v999 = vpop.permute.xlu0 %998
    %1001 = vset.pattern.permute.xlu0 1
    %1002 = vperm.xlu0 %1001, %v932
    %v1003 = vpop.permute.xlu0 %1002
    %vm1005 = vcmask 261120
    %v1007 = vsel %vm1005, %v985, 0
    %v1010 = vsel %vm1005, %v986, 0
    %v1013 = vsel %vm1005, %v987, 0
    %v1016 = vsel %vm1005, %v988, 0
    %1018 = vmatprep.subr.mxu0 %v970
    %1019 = vmatpush1.msra.mxu0 %v969
    %1020 = vmatprep.subr.mxu0 %v974
    %1021 = vmatpush1.msra.mxu0 %v973
    %1022 = vmatprep.subr.mxu0 %v978
    %1023 = vmatpush1.msra.mxu0 %v977
    %1024 = vmatprep.subr.mxu0 %v982
    %1025 = vmatpush1.msra.mxu0 %v981
    %1026 = vmatprep.subr.mxu0 0.0
    %1027 = vmatpush1.msra.mxu0 0.0
    %1028 = vmatprep.subr.mxu0 0.0
    %1029 = vmatpush1.msra.mxu0 0.0
    %1030 = vmatprep.subr.mxu0 0.0
    %1031 = vmatpush1.msra.mxu0 0.0
    %1032 = vmatprep.subr.mxu0 0.0
    %1033 = vmatpush1.msra.mxu0 0.0
    %1034 = vmatprep.subr.mxu0 0.0
    %1035 = vmatpush1.msra.mxu0 0.0
    %1036 = vmatprep.subr.mxu0 0.0
    %1037 = vmatpush1.msra.mxu0 0.0
    %1038 = vmatprep.subr.mxu0 0.0
    %1039 = vmatpush1.msra.mxu0 0.0
    %1040 = vmatprep.subr.mxu0 0.0
    %1041 = vmatpush1.msra.mxu0 0.0
    %1042 = vmatprep.subr.mxu0 0.0
    %1043 = vmatpush1.msra.mxu0 0.0
    %1044 = vmatprep.subr.mxu0 0.0
    %1045 = vmatpush1.msra.mxu0 0.0
    %1046 = vmatprep.subr.mxu0 0.0
    %1047 = vmatpush1.msra.mxu0 0.0
    %1048 = vmatprep.subr.mxu0 0.0
    %1049 = vmatpush1.msra.mxu0 0.0
    %1050 = vmatprep.subr.mxu0 0.0
    %1051 = vmatpush1.msra.mxu0 0.0
    %1052 = vmatprep.subr.mxu0 0.0
    %1053 = vmatpush1.msra.mxu0 0.0
    %1054 = vmatprep.subr.mxu0 0.0
    %1055 = vmatpush1.msra.mxu0 0.0
    %1056 = vmatprep.subr.mxu0 0.0
    %1057 = vmatpush1.msra.mxu0 0.0
    %1058 = vmatprep.subr.mxu0 0.0
    %1059 = vmatpush1.msra.mxu0 0.0
    %1060 = vmatprep.subr.mxu0 0.0
    %1061 = vmatpush1.msra.mxu0 0.0
    %1062 = vmatprep.subr.mxu0 0.0
    %1063 = vmatpush1.msra.mxu0 0.0
    %1064 = vmatprep.subr.mxu0 0.0
    %1065 = vmatpush1.msra.mxu0 0.0
    %1066 = vmatprep.subr.mxu0 0.0
    %1067 = vmatpush1.msra.mxu0 0.0
    %1068 = vmatprep.subr.mxu0 0.0
    %1069 = vmatpush1.msra.mxu0 0.0
    %1070 = vmatprep.subr.mxu0 0.0
    %1071 = vmatpush1.msra.mxu0 0.0
    %1072 = vmatprep.subr.mxu0 0.0
    %1073 = vmatpush1.msra.mxu0 0.0
    %1074 = vmatprep.subr.mxu0 0.0
    %1075 = vmatpush1.msra.mxu0 0.0
    %1076 = vmatprep.subr.mxu0 0.0
    %1077 = vmatpush1.msra.mxu0 0.0
    %1078 = vmatprep.subr.mxu0 0.0
    %1079 = vmatpush1.msra.mxu0 0.0
    %1080 = vmatprep.subr.mxu0 0.0
    %1081 = vmatpush1.msra.mxu0 0.0
    %1082 = vmatprep.mubr.f32.mxu0 0.0
    %1083 = vmatmul.mubr.f32.gmra.mrb[0].mxu0 %v1007
    %v1084 = vpop.f32.mrb[0].mxu0
    %v1085 = vadd.f32 %v991, %v1084
    %v1086 = vpop.f32.mrb[0].mxu0
    %v1087 = vadd.f32 %v991, %v1086
    %1088 = vmatprep.mubr.f32.mxu0 0.0
    %1089 = vmatmul.mubr.f32.gmra.mrb[0].mxu0 %v1010
    %v1090 = vpop.f32.mrb[0].mxu0
    %v1091 = vadd.f32 %v995, %v1090
    %v1092 = vpop.f32.mrb[0].mxu0
    %v1093 = vadd.f32 %v995, %v1092
    %1094 = vmatprep.mubr.f32.mxu0 0.0
    %1095 = vmatmul.mubr.f32.gmra.mrb[0].mxu0 %v1013
    %v1096 = vpop.f32.mrb[0].mxu0
    %v1097 = vadd.f32 %v999, %v1096
    %v1098 = vpop.f32.mrb[0].mxu0
    %v1099 = vadd.f32 %v999, %v1098
    %1100 = vmatprep.mubr.f32.mxu0 0.0
    %1101 = vmatmul.mubr.f32.gmra.mrb[0].mxu0 %v1016
    %v1102 = vpop.f32.mrb[0].mxu0
    %v1103 = vadd.f32 %v1003, %v1102
    %v1104 = vpop.f32.mrb[0].mxu0
    %v1105 = vadd.f32 %v1003, %v1104
    %1106 = vdwg.mxu0
    %1107 = vmatprep.subr.mxu0 %v972
    %1108 = vmatpush1.msra.mxu0 %v971
    %1109 = vmatprep.subr.mxu0 %v976
    %1110 = vmatpush1.msra.mxu0 %v975
    %1111 = vmatprep.subr.mxu0 %v980
    %1112 = vmatpush1.msra.mxu0 %v979
    %1113 = vmatprep.subr.mxu0 %v984
    %1114 = vmatpush1.msra.mxu0 %v983
    %1115 = vmatprep.subr.mxu0 0.0
    %1116 = vmatpush1.msra.mxu0 0.0
    %1117 = vmatprep.subr.mxu0 0.0
    %1118 = vmatpush1.msra.mxu0 0.0
    %1119 = vmatprep.subr.mxu0 0.0
    %1120 = vmatpush1.msra.mxu0 0.0
    %1121 = vmatprep.subr.mxu0 0.0
    %1122 = vmatpush1.msra.mxu0 0.0
    %1123 = vmatprep.subr.mxu0 0.0
    %1124 = vmatpush1.msra.mxu0 0.0
    %1125 = vmatprep.subr.mxu0 0.0
    %1126 = vmatpush1.msra.mxu0 0.0
    %1127 = vmatprep.subr.mxu0 0.0
    %1128 = vmatpush1.msra.mxu0 0.0
    %1129 = vmatprep.subr.mxu0 0.0
    %1130 = vmatpush1.msra.mxu0 0.0
    %1131 = vmatprep.subr.mxu0 0.0
    %1132 = vmatpush1.msra.mxu0 0.0
    %1133 = vmatprep.subr.mxu0 0.0
    %1134 = vmatpush1.msra.mxu0 0.0
    %1135 = vmatprep.subr.mxu0 0.0
    %1136 = vmatpush1.msra.mxu0 0.0
    %1137 = vmatprep.subr.mxu0 0.0
    %1138 = vmatpush1.msra.mxu0 0.0
    %1139 = vmatprep.subr.mxu0 0.0
    %1140 = vmatpush1.msra.mxu0 0.0
    %1141 = vmatprep.subr.mxu0 0.0
    %1142 = vmatpush1.msra.mxu0 0.0
    %1143 = vmatprep.subr.mxu0 0.0
    %1144 = vmatpush1.msra.mxu0 0.0
    %1145 = vmatprep.subr.mxu0 0.0
    %1146 = vmatpush1.msra.mxu0 0.0
    %1147 = vmatprep.subr.mxu0 0.0
    %1148 = vmatpush1.msra.mxu0 0.0
    %1149 = vmatprep.subr.mxu0 0.0
    %1150 = vmatpush1.msra.mxu0 0.0
    %1151 = vmatprep.subr.mxu0 0.0
    %1152 = vmatpush1.msra.mxu0 0.0
    %1153 = vmatprep.subr.mxu0 0.0
    %1154 = vmatpush1.msra.mxu0 0.0
    %1155 = vmatprep.subr.mxu0 0.0
    %1156 = vmatpush1.msra.mxu0 0.0
    %1157 = vmatprep.subr.mxu0 0.0
    %1158 = vmatpush1.msra.mxu0 0.0
    %1159 = vmatprep.subr.mxu0 0.0
    %1160 = vmatpush1.msra.mxu0 0.0
    %1161 = vmatprep.subr.mxu0 0.0
    %1162 = vmatpush1.msra.mxu0 0.0
    %1163 = vmatprep.subr.mxu0 0.0
    %1164 = vmatpush1.msra.mxu0 0.0
    %1165 = vmatprep.subr.mxu0 0.0
    %1166 = vmatpush1.msra.mxu0 0.0
    %1167 = vmatprep.subr.mxu0 0.0
    %1168 = vmatpush1.msra.mxu0 0.0
    %1169 = vmatprep.subr.mxu0 0.0
    %1170 = vmatpush1.msra.mxu0 0.0
    %1171 = vmatprep.mubr.f32.mxu0 0.0
    %1172 = vmatmul.mubr.f32.gmra.mrb[0].mxu0 %v1007
    %v1173 = vpop.f32.mrb[0].mxu0
    %v1174 = vadd.f32 %v991, %v1173
    %v1175 = vpop.f32.mrb[0].mxu0
    %v1176 = vadd.f32 %v991, %v1175
    %1177 = vmatprep.mubr.f32.mxu0 0.0
    %1178 = vmatmul.mubr.f32.gmra.mrb[0].mxu0 %v1010
    %v1179 = vpop.f32.mrb[0].mxu0
    %v1180 = vadd.f32 %v995, %v1179
    %v1181 = vpop.f32.mrb[0].mxu0
    %v1182 = vadd.f32 %v995, %v1181
    %1183 = vmatprep.mubr.f32.mxu0 0.0
    %1184 = vmatmul.mubr.f32.gmra.mrb[0].mxu0 %v1013
    %v1185 = vpop.f32.mrb[0].mxu0
    %v1186 = vadd.f32 %v999, %v1185
    %v1187 = vpop.f32.mrb[0].mxu0
    %v1188 = vadd.f32 %v999, %v1187
    %1189 = vmatprep.mubr.f32.mxu0 0.0
    %1190 = vmatmul.mubr.f32.gmra.mrb[0].mxu0 %v1016
    %v1191 = vpop.f32.mrb[0].mxu0
    %v1192 = vadd.f32 %v1003, %v1191
    %v1193 = vpop.f32.mrb[0].mxu0
    %v1194 = vadd.f32 %v1003, %v1193
    %1195 = vdwg.mxu0
    %v1196 = vmax.f32 %v1085, 0.0
    %v1197 = vmax.f32 %v1087, 0.0
    %v1198 = vmax.f32 %v1174, 0.0
    %v1199 = vmax.f32 %v1176, 0.0
    %v1200 = vmax.f32 %v1091, 0.0
    %v1201 = vmax.f32 %v1093, 0.0
    %v1202 = vmax.f32 %v1180, 0.0
    %v1203 = vmax.f32 %v1182, 0.0
    %v1204 = vmax.f32 %v1097, 0.0
    %v1205 = vmax.f32 %v1099, 0.0
    %v1206 = vmax.f32 %v1186, 0.0
    %v1207 = vmax.f32 %v1188, 0.0
    %v1208 = vmax.f32 %v1103, 0.0
    %v1209 = vmax.f32 %v1105, 0.0
    %v1210 = vmax.f32 %v1192, 0.0
    %v1211 = vmax.f32 %v1194, 0.0
    %v1212 = vld [vmem:[%s5] sm:$0x1]
    %v1213 = vld [vmem:[%s6] sm:$0x1]
    %1215 = vset.pattern.permute.xlu0 2
    %1216 = vperm.xlu0 %1215, %v1213
    %v1217 = vpop.permute.xlu0 %1216
    %v1220 = vsel %vm1005, %v1212, 0
    %1222 = vmatprep.subr.mxu0 %v1197
    %1223 = vmatpush1.msra.mxu0 %v1196
    %1224 = vmatprep.subr.mxu0 %v1201
    %1225 = vmatpush1.msra.mxu0 %v1200
    %1226 = vmatprep.subr.mxu0 %v1205
    %1227 = vmatpush1.msra.mxu0 %v1204
    %1228 = vmatprep.subr.mxu0 %v1209
    %1229 = vmatpush1.msra.mxu0 %v1208
    %1230 = vmatprep.subr.mxu0 0.0
    %1231 = vmatpush1.msra.mxu0 0.0
    %1232 = vmatprep.subr.mxu0 0.0
    %1233 = vmatpush1.msra.mxu0 0.0
    %1234 = vmatprep.subr.mxu0 0.0
    %1235 = vmatpush1.msra.mxu0 0.0
    %1236 = vmatprep.subr.mxu0 0.0
    %1237 = vmatpush1.msra.mxu0 0.0
    %1238 = vmatprep.subr.mxu0 0.0
    %1239 = vmatpush1.msra.mxu0 0.0
    %1240 = vmatprep.subr.mxu0 0.0
    %1241 = vmatpush1.msra.mxu0 0.0
    %1242 = vmatprep.subr.mxu0 0.0
    %1243 = vmatpush1.msra.mxu0 0.0
    %1244 = vmatprep.subr.mxu0 0.0
    %1245 = vmatpush1.msra.mxu0 0.0
    %1246 = vmatprep.subr.mxu0 0.0
    %1247 = vmatpush1.msra.mxu0 0.0
    %1248 = vmatprep.subr.mxu0 0.0
    %1249 = vmatpush1.msra.mxu0 0.0
    %1250 = vmatprep.subr.mxu0 0.0
    %1251 = vmatpush1.msra.mxu0 0.0
    %1252 = vmatprep.subr.mxu0 0.0
    %1253 = vmatpush1.msra.mxu0 0.0
    %1254 = vmatprep.subr.mxu0 0.0
    %1255 = vmatpush1.msra.mxu0 0.0
    %1256 = vmatprep.subr.mxu0 0.0
    %1257 = vmatpush1.msra.mxu0 0.0
    %1258 = vmatprep.subr.mxu0 0.0
    %1259 = vmatpush1.msra.mxu0 0.0
    %1260 = vmatprep.subr.mxu0 0.0
    %1261 = vmatpush1.msra.mxu0 0.0
    %1262 = vmatprep.subr.mxu0 0.0
    %1263 = vmatpush1.msra.mxu0 0.0
    %1264 = vmatprep.subr.mxu0 0.0
    %1265 = vmatpush1.msra.mxu0 0.0
    %1266 = vmatprep.subr.mxu0 0.0
    %1267 = vmatpush1.msra.mxu0 0.0
    %1268 = vmatprep.subr.mxu0 0.0
    %1269 = vmatpush1.msra.mxu0 0.0
    %1270 = vmatprep.subr.mxu0 0.0
    %1271 = vmatpush1.msra.mxu0 0.0
    %1272 = vmatprep.subr.mxu0 0.0
    %1273 = vmatpush1.msra.mxu0 0.0
    %1274 = vmatprep.subr.mxu0 0.0
    %1275 = vmatpush1.msra.mxu0 0.0
    %1276 = vmatprep.subr.mxu0 0.0
    %1277 = vmatpush1.msra.mxu0 0.0
    %1278 = vmatprep.subr.mxu0 0.0
    %1279 = vmatpush1.msra.mxu0 0.0
    %1280 = vmatprep.subr.mxu0 0.0
    %1281 = vmatpush1.msra.mxu0 0.0
    %1282 = vmatprep.subr.mxu0 0.0
    %1283 = vmatpush1.msra.mxu0 0.0
    %1284 = vmatprep.subr.mxu0 0.0
    %1285 = vmatpush1.msra.mxu0 0.0
    %1286 = vmatprep.mubr.f32.mxu0 0.0
    %1287 = vmatmul.mubr.f32.gmra.mrb[0].mxu0 %v1220
    %v1288 = vpop.f32.mrb[0].mxu0
    %v1289 = vadd.f32 %v1217, %v1288
    %v1290 = vpop.f32.mrb[0].mxu0
    %v1291 = vadd.f32 %v1217, %v1290
    %1292 = vdwg.mxu0
    %1293 = vmatprep.subr.mxu0 %v1199
    %1294 = vmatpush1.msra.mxu0 %v1198
    %1295 = vmatprep.subr.mxu0 %v1203
    %1296 = vmatpush1.msra.mxu0 %v1202
    %1297 = vmatprep.subr.mxu0 %v1207
    %1298 = vmatpush1.msra.mxu0 %v1206
    %1299 = vmatprep.subr.mxu0 %v1211
    %1300 = vmatpush1.msra.mxu0 %v1210
    %1301 = vmatprep.subr.mxu0 0.0
    %1302 = vmatpush1.msra.mxu0 0.0
    %1303 = vmatprep.subr.mxu0 0.0
    %1304 = vmatpush1.msra.mxu0 0.0
    %1305 = vmatprep.subr.mxu0 0.0
    %1306 = vmatpush1.msra.mxu0 0.0
    %1307 = vmatprep.subr.mxu0 0.0
    %1308 = vmatpush1.msra.mxu0 0.0
    %1309 = vmatprep.subr.mxu0 0.0
    %1310 = vmatpush1.msra.mxu0 0.0
    %1311 = vmatprep.subr.mxu0 0.0
    %1312 = vmatpush1.msra.mxu0 0.0
    %1313 = vmatprep.subr.mxu0 0.0
    %1314 = vmatpush1.msra.mxu0 0.0
    %1315 = vmatprep.subr.mxu0 0.0
    %1316 = vmatpush1.msra.mxu0 0.0
    %1317 = vmatprep.subr.mxu0 0.0
    %1318 = vmatpush1.msra.mxu0 0.0
    %1319 = vmatprep.subr.mxu0 0.0
    %1320 = vmatpush1.msra.mxu0 0.0
    %1321 = vmatprep.subr.mxu0 0.0
    %1322 = vmatpush1.msra.mxu0 0.0
    %1323 = vmatprep.subr.mxu0 0.0
    %1324 = vmatpush1.msra.mxu0 0.0
    %1325 = vmatprep.subr.mxu0 0.0
    %1326 = vmatpush1.msra.mxu0 0.0
    %1327 = vmatprep.subr.mxu0 0.0
    %1328 = vmatpush1.msra.mxu0 0.0
    %1329 = vmatprep.subr.mxu0 0.0
    %1330 = vmatpush1.msra.mxu0 0.0
    %1331 = vmatprep.subr.mxu0 0.0
    %1332 = vmatpush1.msra.mxu0 0.0
    %1333 = vmatprep.subr.mxu0 0.0
    %1334 = vmatpush1.msra.mxu0 0.0
    %1335 = vmatprep.subr.mxu0 0.0
    %1336 = vmatpush1.msra.mxu0 0.0
    %1337 = vmatprep.subr.mxu0 0.0
    %1338 = vmatpush1.msra.mxu0 0.0
    %1339 = vmatprep.subr.mxu0 0.0
    %1340 = vmatpush1.msra.mxu0 0.0
    %1341 = vmatprep.subr.mxu0 0.0
    %1342 = vmatpush1.msra.mxu0 0.0
    %1343 = vmatprep.subr.mxu0 0.0
    %1344 = vmatpush1.msra.mxu0 0.0
    %1345 = vmatprep.subr.mxu0 0.0
    %1346 = vmatpush1.msra.mxu0 0.0
    %1347 = vmatprep.subr.mxu0 0.0
    %1348 = vmatpush1.msra.mxu0 0.0
    %1349 = vmatprep.subr.mxu0 0.0
    %1350 = vmatpush1.msra.mxu0 0.0
    %1351 = vmatprep.subr.mxu0 0.0
    %1352 = vmatpush1.msra.mxu0 0.0
    %1353 = vmatprep.subr.mxu0 0.0
    %1354 = vmatpush1.msra.mxu0 0.0
    %1355 = vmatprep.subr.mxu0 0.0
    %1356 = vmatpush1.msra.mxu0 0.0
    %1357 = vmatprep.mubr.f32.mxu0 0.0
    %1358 = vmatmul.mubr.f32.gmra.mrb[0].mxu0 %v1220
    %v1359 = vpop.f32.mrb[0].mxu0
    %v1360 = vadd.f32 %v1217, %v1359
    %v1361 = vpop.f32.mrb[0].mxu0
    %v1362 = vadd.f32 %v1217, %v1361
    %1363 = vdwg.mxu0
    %v1368 = vcombine.low %v1289, %v1291
    %v1369 = vcombine.low %v1360, %v1362
    %v1371 = vunpack.c.l.s4 1966171168
    %v1372 = vunpack.c.0.s8 %v1371
    %v1373 = vlaneseq
    %v1374 = vshrl.u32 %v1373, 7
    %v1375 = vsub.s32 %v1372, %v1374
    %v1376 = vrot.slane %v1368, %v1375
    %v1378 = vunpack.c.l.s4 1966171168
    %v1379 = vunpack.c.0.s8 %v1378
    %v1380 = vlaneseq
    %v1381 = vshrl.u32 %v1380, 7
    %v1382 = vsub.s32 %v1379, %v1381
    %v1383 = vrot.slane %v1369, %v1382
    %v1384 = vcombine.low %v1376, %v1383
    %v1386 = vunpack.c.l.s4 1966171168
    %v1387 = vunpack.c.0.s8 %v1386
    %v1388 = vlaneseq
    %v1389 = vshrl.u32 %v1388, 7
    %v1390 = vsub.s32 %v1387, %v1389
    %v1391 = vrot.slane %v1384, %v1390
    %v1393 = vlaneseq
    %vm1394 = vcmp.ge.s32.totalorder %v1393, 0
    %vm1395 = vcmp.lt.s32.totalorder %v1393, 512
    %vm1396 = vmand %vm1394, %vm1395
    %1397 = vst.msk [vmem:[#allocation2] sm:$0xf] %vm1396, %v1391
    // Predicated region
    $region30: #{mlp_q_forward.1} parent=1 // pred_check
      _
    $region31: #{mlp_q_forward.1} parent=1 // pred_check_branch
      %1399 = sbr.rel (0) target = $region33
    $region32: #{mlp_q_forward.1} parent=1 // pred_region
      %s1401 = ssub.s32 64, 64
      %1402 = vsyncadd [#allocation3], %s1401
      %s1404 = sshll.u32 [#allocation2], 4
      %s1405 = int_to_ptr.vmem [resolvable:$true] %s1404
      %1407 = dma.vmem_to_hbm [thread:$0]  %s1405, 64, %s7, [#allocation3]
    $region33: #{mlp_q_forward.1} parent=1 // pred_fallthru
      _
    // Predicated region
    $region34: #{mlp_q_forward.1} parent=1 // pred_check
      _
    $region35: #{mlp_q_forward.1} parent=1 // pred_check_branch
      %1409 = sbr.rel (0) target = $region37
    $region36: #{mlp_q_forward.1} parent=1 // pred_region
      %1410 = dma.done [#allocation3], 64
    $region37: #{mlp_q_forward.1} parent=1 // pred_fallthru
      _
    %1411 = vsyncpa [#allocation3], 1

</llo_original>
